<compile_context>
chip_gen: v7x
topology: tpu7x:2x2x1
jax: 0.10.0
libtpu: 0.0.40
codegen_flags: <defaults>
</compile_context>

<pallas_src>
import jax
import jax.numpy as jnp
from jax.experimental import pallas as pl
from jax.experimental.pallas import tpu as pltpu


def _latent_mapping_kernel(x_ref, w1_ref, b1_ref, w2_ref, b2_ref, o_ref):
    # Cast the f32 x tile to bf16 in-kernel (feeds the MXU; f32 accumulate).
    x = x_ref[...].astype(w1_ref.dtype)
    h = jnp.dot(x, w1_ref[...], preferred_element_type=jnp.float32)
    h = jnp.tanh(h + b1_ref[...])                      # bias-add (VPU) + tanh (EUP), f32
    out = jnp.dot(h.astype(w2_ref.dtype), w2_ref[...],
                  preferred_element_type=jnp.float32) + b2_ref[...]
    o_ref[...] = out.astype(o_ref.dtype)


def prepare_latent_mapping_params(params, compute_dtype=jnp.bfloat16):
    """One-time param prep: bf16 weights (in_dim, out_dim), f32 (1, n) biases."""
    (w1, b1), (w2, b2) = params
    return (
        (w1.astype(compute_dtype), b1.reshape(1, -1).astype(jnp.float32)),
        (w2.astype(compute_dtype), b2.reshape(1, -1).astype(jnp.float32)),
    )


def latent_mapping_forward(x, prepared_params, *, batch_tile=1024):
    """Fused LatentMappingLayer forward. x: (B, input_dim) float32."""
    (w1, b1), (w2, b2) = prepared_params
    B, in_dim = x.shape
    hid = w1.shape[1]            # 512
    out_dim = w2.shape[1]

    # Batch tiling: single grid step for small batches (no padding, no per-step
    # overhead); otherwise tile at `batch_tile` rows (multiple of 16 for
    # bf16-friendly sublane packing).  Ragged last block handled by Pallas.
    if B <= batch_tile:
        tb = B
    else:
        tb = max((batch_tile // 16) * 16, 16)
    grid = (pl.cdiv(B, tb),)

    def const_spec(arr):
        # Full-array block, identical index for every grid step -> stays
        # VMEM-resident; Pallas skips re-DMA across steps.
        return pl.BlockSpec(arr.shape, lambda i: (0, 0))

    cost = pl.CostEstimate(
        flops=2 * B * (in_dim * hid + hid * out_dim),
        transcendentals=B * hid,
        bytes_accessed=(x.size * x.dtype.itemsize
                        + w1.size * w1.dtype.itemsize
                        + b1.size * b1.dtype.itemsize
                        + w2.size * w2.dtype.itemsize
                        + b2.size * b2.dtype.itemsize
                        + B * out_dim * 4),
    )

    return pl.pallas_call(
        _latent_mapping_kernel,
        out_shape=jax.ShapeDtypeStruct((B, out_dim), jnp.float32),
        grid_spec=pltpu.PrefetchScalarGridSpec(
            num_scalar_prefetch=0,
            grid=grid,
            in_specs=[
                pl.BlockSpec((tb, in_dim), lambda i: (i, 0)),   # x tile, unpadded K
                const_spec(w1), const_spec(b1),
                const_spec(w2), const_spec(b2),
            ],
            out_specs=pl.BlockSpec((tb, out_dim), lambda i: (i, 0)),
        ),
        compiler_params=pltpu.CompilerParams(
            dimension_semantics=("parallel",),
            vmem_limit_bytes=32 << 20,
        ),
        cost_estimate=cost,
    )(x, w1, b1, w2, b2)


def init_latent_mapping_params(key, input_dim, output_dim, hidden_dim=512):
    """PyTorch-style uniform(+/- 1/sqrt(fan_in)) init; weights stored (in_dim, out_dim)."""
    dims = [(input_dim, hidden_dim), (hidden_dim, output_dim)]
    params = []
    for din, dout in dims:
        key, kw, kb = jax.random.split(key, 3)
        bound = 1.0 / jnp.sqrt(din)
        w = jax.random.uniform(kw, (din, dout), jnp.float32, -bound, bound)
        b = jax.random.uniform(kb, (dout,), jnp.float32, -bound, bound)
        params.append((w, b))
    return params


def latent_mapping_reference(x, params):
    """Plain-JAX (f32) reference of the inference forward pass."""
    (w1, b1), (w2, b2) = params
    h = jnp.tanh(x @ w1 + b1)
    return h @ w2 + b2


if __name__ == "__main__":
    key = jax.random.PRNGKey(0)
    kx, kp = jax.random.split(key)

    batch, input_dim, output_dim = 16, 64, 32
    x = jax.random.normal(kx, (batch, input_dim), jnp.float32)
    params = init_latent_mapping_params(kp, input_dim, output_dim)
    prepared = prepare_latent_mapping_params(params)
    ref = latent_mapping_reference(x, params)

    # 1) Default path: single grid step (grid=(1,)), no padding anywhere.
    out = jax.block_until_ready(latent_mapping_forward(x, prepared))
    assert out.shape == (batch, output_dim)
    assert jnp.allclose(out, ref, atol=5e-2, rtol=5e-2), \
        float(jnp.max(jnp.abs(out - ref)))

    # 2) Tiled path: batch_tile=8 -> grid=(2,), exercises pipelining / megacore.
    out2 = jax.block_until_ready(latent_mapping_forward(x, prepared, batch_tile=8))
    assert out2.shape == (batch, output_dim)
    assert jnp.allclose(out2, ref, atol=5e-2, rtol=5e-2), \
        float(jnp.max(jnp.abs(out2 - ref)))

    print("KERNEL_OK")
</pallas_src>

<mosaic_0001>
module attributes {stable_mosaic.version = 11 : i64} {
  func.func @_latent_mapping_kernel(%arg0: i32, %arg1: memref<16x64xf32, #tpu.memory_space<vmem>>, %arg2: memref<64x512xbf16, #tpu.memory_space<vmem>>, %arg3: memref<1x512xf32, #tpu.memory_space<vmem>>, %arg4: memref<512x32xbf16, #tpu.memory_space<vmem>>, %arg5: memref<1x32xf32, #tpu.memory_space<vmem>>, %arg6: memref<16x32xf32, #tpu.memory_space<vmem>>) attributes {dimension_semantics = [#tpu.dimension_semantics<parallel>], iteration_bounds = array<i64: 1>, scalar_prefetch = 0 : i64, scratch_operands = 0 : i64, tpu.core_type = #tpu.core_type<tc>, window_params = [{transform_indices = @transform_0, window_bounds = array<i64: 16, 64>}, {pipeline_mode = #tpu.pipeline_mode<synchronous>, transform_indices = @transform_1, window_bounds = array<i64: 64, 512>}, {pipeline_mode = #tpu.pipeline_mode<synchronous>, transform_indices = @transform_2, window_bounds = array<i64: 1, 512>}, {pipeline_mode = #tpu.pipeline_mode<synchronous>, transform_indices = @transform_3, window_bounds = array<i64: 512, 32>}, {pipeline_mode = #tpu.pipeline_mode<synchronous>, transform_indices = @transform_4, window_bounds = array<i64: 1, 32>}, {transform_indices = @transform_5, window_bounds = array<i64: 16, 32>}]} {
    %c0 = arith.constant 0 : index
    %c0_0 = arith.constant 0 : index
    %0 = vector.load %arg1[%c0, %c0_0] : memref<16x64xf32, #tpu.memory_space<vmem>>, vector<16x64xf32>
    %1 = arith.truncf %0 : vector<16x64xf32> to vector<16x64xbf16>
    %c0_1 = arith.constant 0 : index
    %c0_2 = arith.constant 0 : index
    %2 = vector.load %arg2[%c0_1, %c0_2] : memref<64x512xbf16, #tpu.memory_space<vmem>>, vector<64x512xbf16>
    %cst = arith.constant dense<0.000000e+00> : vector<16x512xf32>
    %3 = tpu.matmul %1, %2, %cst {dimension_numbers = #tpu.dot_dimension_numbers<[1], [0], [0], [1], [0, 0, 1, 1], [], []>} : vector<16x64xbf16>, vector<64x512xbf16>, vector<16x512xf32> -> vector<16x512xf32>
    %c0_3 = arith.constant 0 : index
    %c0_4 = arith.constant 0 : index
    %4 = vector.load %arg3[%c0_3, %c0_4] : memref<1x512xf32, #tpu.memory_space<vmem>>, vector<1x512xf32>
    %5 = vector.broadcast %4 : vector<1x512xf32> to vector<16x512xf32>
    %6 = arith.addf %3, %5 : vector<16x512xf32>
    %7 = math.tanh %6 : vector<16x512xf32>
    %8 = arith.truncf %7 : vector<16x512xf32> to vector<16x512xbf16>
    %c0_5 = arith.constant 0 : index
    %c0_6 = arith.constant 0 : index
    %9 = vector.load %arg4[%c0_5, %c0_6] : memref<512x32xbf16, #tpu.memory_space<vmem>>, vector<512x32xbf16>
    %cst_7 = arith.constant dense<0.000000e+00> : vector<16x32xf32>
    %10 = tpu.matmul %8, %9, %cst_7 {dimension_numbers = #tpu.dot_dimension_numbers<[1], [0], [0], [1], [0, 0, 1, 1], [], []>} : vector<16x512xbf16>, vector<512x32xbf16>, vector<16x32xf32> -> vector<16x32xf32>
    %c0_8 = arith.constant 0 : index
    %c0_9 = arith.constant 0 : index
    %11 = vector.load %arg5[%c0_8, %c0_9] : memref<1x32xf32, #tpu.memory_space<vmem>>, vector<1x32xf32>
    %12 = vector.broadcast %11 : vector<1x32xf32> to vector<16x32xf32>
    %13 = arith.addf %10, %12 : vector<16x32xf32>
    %c0_10 = arith.constant 0 : index
    %c0_11 = arith.constant 0 : index
    %14 = vector.load %arg6[%c0_10, %c0_11] : memref<16x32xf32, #tpu.memory_space<vmem>>, vector<16x32xf32>
    tpu.vector_store %arg6[%c0_10, %c0_11], %13 {strides = array<i32>} : memref<16x32xf32, #tpu.memory_space<vmem>>, vector<16x32xf32>,
    return
  }
  func.func @transform_0(%arg0: i32) -> (i32, i32) {
    %c0_i32 = arith.constant 0 : i32
    %c0_i32_0 = arith.constant 0 : i32
    return %arg0, %c0_i32 : i32, i32
  }
  func.func @transform_1(%arg0: i32) -> (i32, i32) {
    %c0_i32 = arith.constant 0 : i32
    %c0_i32_0 = arith.constant 0 : i32
    %c0_i32_1 = arith.constant 0 : i32
    return %c0_i32, %c0_i32_0 : i32, i32
  }
  func.func @transform_2(%arg0: i32) -> (i32, i32) {
    %c0_i32 = arith.constant 0 : i32
    %c0_i32_0 = arith.constant 0 : i32
    %c0_i32_1 = arith.constant 0 : i32
    return %c0_i32, %c0_i32_0 : i32, i32
  }
  func.func @transform_3(%arg0: i32) -> (i32, i32) {
    %c0_i32 = arith.constant 0 : i32
    %c0_i32_0 = arith.constant 0 : i32
    %c0_i32_1 = arith.constant 0 : i32
    return %c0_i32, %c0_i32_0 : i32, i32
  }
  func.func @transform_4(%arg0: i32) -> (i32, i32) {
    %c0_i32 = arith.constant 0 : i32
    %c0_i32_0 = arith.constant 0 : i32
    %c0_i32_1 = arith.constant 0 : i32
    return %c0_i32, %c0_i32_0 : i32, i32
  }
  func.func @transform_5(%arg0: i32) -> (i32, i32) {
    %c0_i32 = arith.constant 0 : i32
    %c0_i32_0 = arith.constant 0 : i32
    return %arg0, %c0_i32 : i32, i32
  }
}

</mosaic_0001>

<llo_original>
// kernel: tpu_custom_call.1
$region0: #{tpu_custom_call.1}
  #allocation0 [shape = 'u32[]', space=smem, size = 0x4, offset = 0x4, fixed_abs, tag = 'smem constant byte address 0x4 - core index']
  #allocation1 [shape = 'u32[144,128]{1,0:T(1,128)}', space=vmem, size = 0x12000, scoped, tag = 'internal scratch']
  %s0 = inlined_call_operand.vmem [shape: f32[16,64], index: 0, kind: input, shape index: {}]
  %s1 = inlined_call_operand.vmem [shape: bf16[64,512], index: 1, kind: input, shape index: {}]
  %s2 = inlined_call_operand.vmem [shape: f32[1,512], index: 2, kind: input, shape index: {}]
  %s3 = inlined_call_operand.vmem [shape: bf16[512,32], index: 3, kind: input, shape index: {}]
  %s4 = inlined_call_operand.vmem [shape: f32[1,32], index: 4, kind: input, shape index: {}]
  %s5 = inlined_call_operand.hbm [shape: f32[16,32], index: 5, kind: output, shape index: {}]
  %s6 = sld [smem:[#allocation0]]
  $region30: #{tpu_custom_call.1} parent=0
    _
  %s8 = ssub.s32 1, %s6
  %s9 = scalar_select 0, %s8, %s6
  $region1: #{tpu_custom_call.1} parent=0
    #allocation2 [shape = 'u8[8192]{0}', space=vmem, size = 0x2000, scoped, tag = 'output window, operand 0, single buffered']
    #allocation3 [shape = 's32[1]{0}', space=sflag, size = 0x4, scoped, tag = 'scoped memory for tpu_custom_call.1']
    %10 = vsyncpa [#allocation3], 0
    // Predicated region
    $region2: #{tpu_custom_call.1} parent=1 // pred_check
      _
    $region3: #{tpu_custom_call.1} parent=1 // pred_check_branch
      %12 = sbr.rel (0) target = $region5
    $region4: #{tpu_custom_call.1} parent=1 // pred_region
      _
    $region5: #{tpu_custom_call.1} parent=1 // pred_fallthru
      _
    // Predicated region
    $region6: #{tpu_custom_call.1} parent=1 // pred_check
      _
    $region7: #{tpu_custom_call.1} parent=1 // pred_check_branch
      %14 = sbr.rel (0) target = $region9
    $region8: #{tpu_custom_call.1} parent=1 // pred_region
      _
    $region9: #{tpu_custom_call.1} parent=1 // pred_fallthru
      _
    // Predicated region
    $region10: #{tpu_custom_call.1} parent=1 // pred_check
      _
    $region11: #{tpu_custom_call.1} parent=1 // pred_check_branch
      %16 = sbr.rel (0) target = $region13
    $region12: #{tpu_custom_call.1} parent=1 // pred_region
      _
    $region13: #{tpu_custom_call.1} parent=1 // pred_fallthru
      _
    // Predicated region
    $region14: #{tpu_custom_call.1} parent=1 // pred_check
      _
    $region15: #{tpu_custom_call.1} parent=1 // pred_check_branch
      %18 = sbr.rel (0) target = $region17
    $region16: #{tpu_custom_call.1} parent=1 // pred_region
      _
    $region17: #{tpu_custom_call.1} parent=1 // pred_fallthru
      _
    // Predicated region
    $region18: #{tpu_custom_call.1} parent=1 // pred_check
      _
    $region19: #{tpu_custom_call.1} parent=1 // pred_check_branch
      %20 = sbr.rel (0) target = $region21
    $region20: #{tpu_custom_call.1} parent=1 // pred_region
      _
    $region21: #{tpu_custom_call.1} parent=1 // pred_fallthru
      _
    %v22 = vld [vmem:[%s0] sm:$0xff]
    %v23 = vld [vmem:[%s0 + $0x8] sm:$0xff]
    %v24 = vpack.c.bf16 %v23, %v22
    %v25 = vld [vmem:[%s1] sm:$0xff]
    %v26 = vld [vmem:[%s1 + $0x8] sm:$0xff]
    %v27 = vld [vmem:[%s1 + $0x10] sm:$0xff]
    %v28 = vld [vmem:[%s1 + $0x18] sm:$0xff]
    %v29 = vld [vmem:[%s1 + $0x20] sm:$0xff]
    %v30 = vld [vmem:[%s1 + $0x28] sm:$0xff]
    %v31 = vld [vmem:[%s1 + $0x30] sm:$0xff]
    %v32 = vld [vmem:[%s1 + $0x38] sm:$0xff]
    %v33 = vld [vmem:[%s1 + $0x40] sm:$0xff]
    %v34 = vld [vmem:[%s1 + $0x48] sm:$0xff]
    %v35 = vld [vmem:[%s1 + $0x50] sm:$0xff]
    %v36 = vld [vmem:[%s1 + $0x58] sm:$0xff]
    %v37 = vld [vmem:[%s1 + $0x60] sm:$0xff]
    %v38 = vld [vmem:[%s1 + $0x68] sm:$0xff]
    %v39 = vld [vmem:[%s1 + $0x70] sm:$0xff]
    %v40 = vld [vmem:[%s1 + $0x78] sm:$0xff]
    %v41 = vld [vmem:[%s2] sm:$0xf]
    %v43 = vlaneseq
    %v44 = vshrl.u32 %v43, 7
    %v45 = vsub.s32 0, %v44
    %v46 = vrot.slane %v41, %v45
    %v47 = vlaneseq
    %v48 = vshrl.u32 %v47, 7
    %v49 = vsub.s32 1, %v48
    %v50 = vrot.slane %v41, %v49
    %v51 = vlaneseq
    %v52 = vshrl.u32 %v51, 7
    %v53 = vsub.s32 2, %v52
    %v54 = vrot.slane %v41, %v53
    %v55 = vlaneseq
    %v56 = vshrl.u32 %v55, 7
    %v57 = vsub.s32 3, %v56
    %v58 = vrot.slane %v41, %v57
    %v79 = vunpack.c.l.b16 %v25
    %v80 = vunpack.c.h.b16 %v25
    %v81 = vunpack.c.l.b16 %v26
    %v82 = vunpack.c.h.b16 %v26
    %v83 = vunpack.c.l.b16 %v27
    %v84 = vunpack.c.h.b16 %v27
    %v85 = vunpack.c.l.b16 %v28
    %v86 = vunpack.c.h.b16 %v28
    %v87 = vunpack.c.l.b16 %v29
    %v88 = vunpack.c.h.b16 %v29
    %v89 = vunpack.c.l.b16 %v30
    %v90 = vunpack.c.h.b16 %v30
    %v91 = vunpack.c.l.b16 %v31
    %v92 = vunpack.c.h.b16 %v31
    %v93 = vunpack.c.l.b16 %v32
    %v94 = vunpack.c.h.b16 %v32
    %v95 = vunpack.c.l.b16 %v33
    %v96 = vunpack.c.h.b16 %v33
    %v97 = vunpack.c.l.b16 %v34
    %v98 = vunpack.c.h.b16 %v34
    %v99 = vunpack.c.l.b16 %v35
    %v100 = vunpack.c.h.b16 %v35
    %v101 = vunpack.c.l.b16 %v36
    %v102 = vunpack.c.h.b16 %v36
    %v103 = vunpack.c.l.b16 %v37
    %v104 = vunpack.c.h.b16 %v37
    %v105 = vunpack.c.l.b16 %v38
    %v106 = vunpack.c.h.b16 %v38
    %v107 = vunpack.c.l.b16 %v39
    %v108 = vunpack.c.h.b16 %v39
    %v109 = vunpack.c.l.b16 %v40
    %v110 = vunpack.c.h.b16 %v40
    %v111 = vpack.c.b16 %v83, %v79
    %v112 = vpack.c.b16 %v84, %v80
    %v113 = vpack.c.b16 %v85, %v81
    %v114 = vpack.c.b16 %v86, %v82
    %v115 = vpack.c.b16 %v91, %v87
    %v116 = vpack.c.b16 %v92, %v88
    %v117 = vpack.c.b16 %v93, %v89
    %v118 = vpack.c.b16 %v94, %v90
    %v119 = vpack.c.b16 %v99, %v95
    %v120 = vpack.c.b16 %v100, %v96
    %v121 = vpack.c.b16 %v101, %v97
    %v122 = vpack.c.b16 %v102, %v98
    %v123 = vpack.c.b16 %v107, %v103
    %v124 = vpack.c.b16 %v108, %v104
    %v125 = vpack.c.b16 %v109, %v105
    %v126 = vpack.c.b16 %v110, %v106
    %vm143 = vcmask 523264
    %v145 = vsel %vm143, %v24, 0
    %147 = vmatprep.subr.bf16.mxu0 %v112
    %148 = vmatpush1.bf16.msra.mxu0 %v111
    %149 = vmatprep.subr.bf16.mxu0 %v116
    %150 = vmatpush1.bf16.msra.mxu0 %v115
    %151 = vmatprep.subr.bf16.mxu0 %v120
    %152 = vmatpush1.bf16.msra.mxu0 %v119
    %153 = vmatprep.subr.bf16.mxu0 %v124
    %154 = vmatpush1.bf16.msra.mxu0 %v123
    %155 = vmatprep.subr.bf16.mxu0 0
    %156 = vmatpush1.bf16.msra.mxu0 0
    %157 = vmatprep.subr.bf16.mxu0 0
    %158 = vmatpush1.bf16.msra.mxu0 0
    %159 = vmatprep.subr.bf16.mxu0 0
    %160 = vmatpush1.bf16.msra.mxu0 0
    %161 = vmatprep.subr.bf16.mxu0 0
    %162 = vmatpush1.bf16.msra.mxu0 0
    %163 = vmatprep.subr.bf16.mxu0 0
    %164 = vmatpush1.bf16.msra.mxu0 0
    %165 = vmatprep.subr.bf16.mxu0 0
    %166 = vmatpush1.bf16.msra.mxu0 0
    %167 = vmatprep.subr.bf16.mxu0 0
    %168 = vmatpush1.bf16.msra.mxu0 0
    %169 = vmatprep.subr.bf16.mxu0 0
    %170 = vmatpush1.bf16.msra.mxu0 0
    %171 = vmatprep.subr.bf16.mxu0 0
    %172 = vmatpush1.bf16.msra.mxu0 0
    %173 = vmatprep.subr.bf16.mxu0 0
    %174 = vmatpush1.bf16.msra.mxu0 0
    %175 = vmatprep.subr.bf16.mxu0 0
    %176 = vmatpush1.bf16.msra.mxu0 0
    %177 = vmatprep.subr.bf16.mxu0 0
    %178 = vmatpush1.bf16.msra.mxu0 0
    %179 = vmatprep.mubr.bf16.mxu0 0
    %180 = vmatmul.mubr.bf16.gmra.mrb[0].mxu0 %v145
    %v181 = vpop.f32.mrb[0].mxu0
    %v182 = vadd.f32 %v46, %v181
    %v183 = vpop.f32.mrb[0].mxu0
    %v184 = vadd.f32 %v50, %v183
    %v185 = vpop.f32.mrb[0].mxu0
    %v186 = vadd.f32 %v46, %v185
    %v187 = vpop.f32.mrb[0].mxu0
    %v188 = vadd.f32 %v50, %v187
    %189 = vdwg.mxu0
    %190 = vmatprep.subr.bf16.mxu0 %v114
    %191 = vmatpush1.bf16.msra.mxu0 %v113
    %192 = vmatprep.subr.bf16.mxu0 %v118
    %193 = vmatpush1.bf16.msra.mxu0 %v117
    %194 = vmatprep.subr.bf16.mxu0 %v122
    %195 = vmatpush1.bf16.msra.mxu0 %v121
    %196 = vmatprep.subr.bf16.mxu0 %v126
    %197 = vmatpush1.bf16.msra.mxu0 %v125
    %198 = vmatprep.subr.bf16.mxu0 0
    %199 = vmatpush1.bf16.msra.mxu0 0
    %200 = vmatprep.subr.bf16.mxu0 0
    %201 = vmatpush1.bf16.msra.mxu0 0
    %202 = vmatprep.subr.bf16.mxu0 0
    %203 = vmatpush1.bf16.msra.mxu0 0
    %204 = vmatprep.subr.bf16.mxu0 0
    %205 = vmatpush1.bf16.msra.mxu0 0
    %206 = vmatprep.subr.bf16.mxu0 0
    %207 = vmatpush1.bf16.msra.mxu0 0
    %208 = vmatprep.subr.bf16.mxu0 0
    %209 = vmatpush1.bf16.msra.mxu0 0
    %210 = vmatprep.subr.bf16.mxu0 0
    %211 = vmatpush1.bf16.msra.mxu0 0
    %212 = vmatprep.subr.bf16.mxu0 0
    %213 = vmatpush1.bf16.msra.mxu0 0
    %214 = vmatprep.subr.bf16.mxu0 0
    %215 = vmatpush1.bf16.msra.mxu0 0
    %216 = vmatprep.subr.bf16.mxu0 0
    %217 = vmatpush1.bf16.msra.mxu0 0
    %218 = vmatprep.subr.bf16.mxu0 0
    %219 = vmatpush1.bf16.msra.mxu0 0
    %220 = vmatprep.subr.bf16.mxu0 0
    %221 = vmatpush1.bf16.msra.mxu0 0
    %222 = vmatprep.mubr.bf16.mxu0 0
    %223 = vmatmul.mubr.bf16.gmra.mrb[0].mxu0 %v145
    %v224 = vpop.f32.mrb[0].mxu0
    %v225 = vadd.f32 %v54, %v224
    %v226 = vpop.f32.mrb[0].mxu0
    %v227 = vadd.f32 %v58, %v226
    %v228 = vpop.f32.mrb[0].mxu0
    %v229 = vadd.f32 %v54, %v228
    %v230 = vpop.f32.mrb[0].mxu0
    %v231 = vadd.f32 %v58, %v230
    %232 = vdwg.mxu0
    %v233 = vtanh.pop %v182
    %v234 = vtanh.pop %v184
    %v235 = vtanh.pop %v225
    %v236 = vtanh.pop %v227
    %v237 = vtanh.pop %v186
    %v238 = vtanh.pop %v188
    %v239 = vtanh.pop %v229
    %v240 = vtanh.pop %v231
    %v241 = vpack.c.bf16 %v237, %v233
    %v242 = vpack.c.bf16 %v238, %v234
    %v243 = vpack.c.bf16 %v239, %v235
    %v244 = vpack.c.bf16 %v240, %v236
    %v245 = vld [vmem:[%s3] sm:$0xf]
    %v246 = vld [vmem:[%s3 + $0x4] sm:$0xf]
    %v247 = vld [vmem:[%s3 + $0x8] sm:$0xf]
    %v248 = vld [vmem:[%s3 + $0xc] sm:$0xf]
    %v249 = vld [vmem:[%s3 + $0x10] sm:$0xf]
    %v250 = vld [vmem:[%s3 + $0x14] sm:$0xf]
    %v251 = vld [vmem:[%s3 + $0x18] sm:$0xf]
    %v252 = vld [vmem:[%s3 + $0x1c] sm:$0xf]
    %v253 = vld [vmem:[%s3 + $0x20] sm:$0xf]
    %v254 = vld [vmem:[%s3 + $0x24] sm:$0xf]
    %v255 = vld [vmem:[%s3 + $0x28] sm:$0xf]
    %v256 = vld [vmem:[%s3 + $0x2c] sm:$0xf]
    %v257 = vld [vmem:[%s3 + $0x30] sm:$0xf]
    %v258 = vld [vmem:[%s3 + $0x34] sm:$0xf]
    %v259 = vld [vmem:[%s3 + $0x38] sm:$0xf]
    %v260 = vld [vmem:[%s3 + $0x3c] sm:$0xf]
    %v261 = vld [vmem:[%s3 + $0x40] sm:$0xf]
    %v262 = vld [vmem:[%s3 + $0x44] sm:$0xf]
    %v263 = vld [vmem:[%s3 + $0x48] sm:$0xf]
    %v264 = vld [vmem:[%s3 + $0x4c] sm:$0xf]
    %v265 = vld [vmem:[%s3 + $0x50] sm:$0xf]
    %v266 = vld [vmem:[%s3 + $0x54] sm:$0xf]
    %v267 = vld [vmem:[%s3 + $0x58] sm:$0xf]
    %v268 = vld [vmem:[%s3 + $0x5c] sm:$0xf]
    %v269 = vld [vmem:[%s3 + $0x60] sm:$0xf]
    %v270 = vld [vmem:[%s3 + $0x64] sm:$0xf]
    %v271 = vld [vmem:[%s3 + $0x68] sm:$0xf]
    %v272 = vld [vmem:[%s3 + $0x6c] sm:$0xf]
    %v273 = vld [vmem:[%s3 + $0x70] sm:$0xf]
    %v274 = vld [vmem:[%s3 + $0x74] sm:$0xf]
    %v275 = vld [vmem:[%s3 + $0x78] sm:$0xf]
    %v276 = vld [vmem:[%s3 + $0x7c] sm:$0xf]
    %v277 = vld [vmem:[%s3 + $0x80] sm:$0xf]
    %v278 = vld [vmem:[%s3 + $0x84] sm:$0xf]
    %v279 = vld [vmem:[%s3 + $0x88] sm:$0xf]
    %v280 = vld [vmem:[%s3 + $0x8c] sm:$0xf]
    %v281 = vld [vmem:[%s3 + $0x90] sm:$0xf]
    %v282 = vld [vmem:[%s3 + $0x94] sm:$0xf]
    %v283 = vld [vmem:[%s3 + $0x98] sm:$0xf]
    %v284 = vld [vmem:[%s3 + $0x9c] sm:$0xf]
    %v285 = vld [vmem:[%s3 + $0xa0] sm:$0xf]
    %v286 = vld [vmem:[%s3 + $0xa4] sm:$0xf]
    %v287 = vld [vmem:[%s3 + $0xa8] sm:$0xf]
    %v288 = vld [vmem:[%s3 + $0xac] sm:$0xf]
    %v289 = vld [vmem:[%s3 + $0xb0] sm:$0xf]
    %v290 = vld [vmem:[%s3 + $0xb4] sm:$0xf]
    %v291 = vld [vmem:[%s3 + $0xb8] sm:$0xf]
    %v292 = vld [vmem:[%s3 + $0xbc] sm:$0xf]
    %v293 = vld [vmem:[%s3 + $0xc0] sm:$0xf]
    %v294 = vld [vmem:[%s3 + $0xc4] sm:$0xf]
    %v295 = vld [vmem:[%s3 + $0xc8] sm:$0xf]
    %v296 = vld [vmem:[%s3 + $0xcc] sm:$0xf]
    %v297 = vld [vmem:[%s3 + $0xd0] sm:$0xf]
    %v298 = vld [vmem:[%s3 + $0xd4] sm:$0xf]
    %v299 = vld [vmem:[%s3 + $0xd8] sm:$0xf]
    %v300 = vld [vmem:[%s3 + $0xdc] sm:$0xf]
    %v301 = vld [vmem:[%s3 + $0xe0] sm:$0xf]
    %v302 = vld [vmem:[%s3 + $0xe4] sm:$0xf]
    %v303 = vld [vmem:[%s3 + $0xe8] sm:$0xf]
    %v304 = vld [vmem:[%s3 + $0xec] sm:$0xf]
    %v305 = vld [vmem:[%s3 + $0xf0] sm:$0xf]
    %v306 = vld [vmem:[%s3 + $0xf4] sm:$0xf]
    %v307 = vld [vmem:[%s3 + $0xf8] sm:$0xf]
    %v308 = vld [vmem:[%s3 + $0xfc] sm:$0xf]
    %v309 = vld [vmem:[%s4] sm:$0x1]
    %v311 = vlaneseq
    %v312 = vshrl.u32 %v311, 7
    %v313 = vsub.s32 0, %v312
    %v314 = vrot.slane %v309, %v313
    %v380 = vunpack.c.l.b16 %v245
    %v381 = vunpack.c.l.b16 %v246
    %v382 = vunpack.c.l.b16 %v247
    %v383 = vunpack.c.l.b16 %v248
    %v384 = vunpack.c.l.b16 %v249
    %v385 = vunpack.c.l.b16 %v250
    %v386 = vunpack.c.l.b16 %v251
    %v387 = vunpack.c.l.b16 %v252
    %v388 = vunpack.c.l.b16 %v253
    %v389 = vunpack.c.l.b16 %v254
    %v390 = vunpack.c.l.b16 %v255
    %v391 = vunpack.c.l.b16 %v256
    %v392 = vunpack.c.l.b16 %v257
    %v393 = vunpack.c.l.b16 %v258
    %v394 = vunpack.c.l.b16 %v259
    %v395 = vunpack.c.l.b16 %v260
    %v396 = vunpack.c.l.b16 %v261
    %v397 = vunpack.c.l.b16 %v262
    %v398 = vunpack.c.l.b16 %v263
    %v399 = vunpack.c.l.b16 %v264
    %v400 = vunpack.c.l.b16 %v265
    %v401 = vunpack.c.l.b16 %v266
    %v402 = vunpack.c.l.b16 %v267
    %v403 = vunpack.c.l.b16 %v268
    %v404 = vunpack.c.l.b16 %v269
    %v405 = vunpack.c.l.b16 %v270
    %v406 = vunpack.c.l.b16 %v271
    %v407 = vunpack.c.l.b16 %v272
    %v408 = vunpack.c.l.b16 %v273
    %v409 = vunpack.c.l.b16 %v274
    %v410 = vunpack.c.l.b16 %v275
    %v411 = vunpack.c.l.b16 %v276
    %v412 = vunpack.c.l.b16 %v277
    %v413 = vunpack.c.l.b16 %v278
    %v414 = vunpack.c.l.b16 %v279
    %v415 = vunpack.c.l.b16 %v280
    %v416 = vunpack.c.l.b16 %v281
    %v417 = vunpack.c.l.b16 %v282
    %v418 = vunpack.c.l.b16 %v283
    %v419 = vunpack.c.l.b16 %v284
    %v420 = vunpack.c.l.b16 %v285
    %v421 = vunpack.c.l.b16 %v286
    %v422 = vunpack.c.l.b16 %v287
    %v423 = vunpack.c.l.b16 %v288
    %v424 = vunpack.c.l.b16 %v289
    %v425 = vunpack.c.l.b16 %v290
    %v426 = vunpack.c.l.b16 %v291
    %v427 = vunpack.c.l.b16 %v292
    %v428 = vunpack.c.l.b16 %v293
    %v429 = vunpack.c.l.b16 %v294
    %v430 = vunpack.c.l.b16 %v295
    %v431 = vunpack.c.l.b16 %v296
    %v432 = vunpack.c.l.b16 %v297
    %v433 = vunpack.c.l.b16 %v298
    %v434 = vunpack.c.l.b16 %v299
    %v435 = vunpack.c.l.b16 %v300
    %v436 = vunpack.c.l.b16 %v301
    %v437 = vunpack.c.l.b16 %v302
    %v438 = vunpack.c.l.b16 %v303
    %v439 = vunpack.c.l.b16 %v304
    %v440 = vunpack.c.l.b16 %v305
    %v441 = vunpack.c.l.b16 %v306
    %v442 = vunpack.c.l.b16 %v307
    %v443 = vunpack.c.l.b16 %v308
    %v444 = vpack.c.b16 %v381, %v380
    %v445 = vpack.c.b16 %v383, %v382
    %v446 = vpack.c.b16 %v385, %v384
    %v447 = vpack.c.b16 %v387, %v386
    %v448 = vpack.c.b16 %v389, %v388
    %v449 = vpack.c.b16 %v391, %v390
    %v450 = vpack.c.b16 %v393, %v392
    %v451 = vpack.c.b16 %v395, %v394
    %v452 = vpack.c.b16 %v397, %v396
    %v453 = vpack.c.b16 %v399, %v398
    %v454 = vpack.c.b16 %v401, %v400
    %v455 = vpack.c.b16 %v403, %v402
    %v456 = vpack.c.b16 %v405, %v404
    %v457 = vpack.c.b16 %v407, %v406
    %v458 = vpack.c.b16 %v409, %v408
    %v459 = vpack.c.b16 %v411, %v410
    %v460 = vpack.c.b16 %v413, %v412
    %v461 = vpack.c.b16 %v415, %v414
    %v462 = vpack.c.b16 %v417, %v416
    %v463 = vpack.c.b16 %v419, %v418
    %v464 = vpack.c.b16 %v421, %v420
    %v465 = vpack.c.b16 %v423, %v422
    %v466 = vpack.c.b16 %v425, %v424
    %v467 = vpack.c.b16 %v427, %v426
    %v468 = vpack.c.b16 %v429, %v428
    %v469 = vpack.c.b16 %v431, %v430
    %v470 = vpack.c.b16 %v433, %v432
    %v471 = vpack.c.b16 %v435, %v434
    %v472 = vpack.c.b16 %v437, %v436
    %v473 = vpack.c.b16 %v439, %v438
    %v474 = vpack.c.b16 %v441, %v440
    %v475 = vpack.c.b16 %v443, %v442
    %508 = vmatprep.subr.bf16.mxu0 0
    %509 = vmatpush1.bf16.msra.mxu0 %v444
    %510 = vmatprep.subr.bf16.mxu0 0
    %511 = vmatpush1.bf16.msra.mxu0 %v445
    %512 = vmatprep.subr.bf16.mxu0 0
    %513 = vmatpush1.bf16.msra.mxu0 %v446
    %514 = vmatprep.subr.bf16.mxu0 0
    %515 = vmatpush1.bf16.msra.mxu0 %v447
    %516 = vmatprep.subr.bf16.mxu0 0
    %517 = vmatpush1.bf16.msra.mxu0 %v448
    %518 = vmatprep.subr.bf16.mxu0 0
    %519 = vmatpush1.bf16.msra.mxu0 %v449
    %520 = vmatprep.subr.bf16.mxu0 0
    %521 = vmatpush1.bf16.msra.mxu0 %v450
    %522 = vmatprep.subr.bf16.mxu0 0
    %523 = vmatpush1.bf16.msra.mxu0 %v451
    %524 = vmatprep.subr.bf16.mxu0 0
    %525 = vmatpush1.bf16.msra.mxu0 %v452
    %526 = vmatprep.subr.bf16.mxu0 0
    %527 = vmatpush1.bf16.msra.mxu0 %v453
    %528 = vmatprep.subr.bf16.mxu0 0
    %529 = vmatpush1.bf16.msra.mxu0 %v454
    %530 = vmatprep.subr.bf16.mxu0 0
    %531 = vmatpush1.bf16.msra.mxu0 %v455
    %532 = vmatprep.subr.bf16.mxu0 0
    %533 = vmatpush1.bf16.msra.mxu0 %v456
    %534 = vmatprep.subr.bf16.mxu0 0
    %535 = vmatpush1.bf16.msra.mxu0 %v457
    %536 = vmatprep.subr.bf16.mxu0 0
    %537 = vmatpush1.bf16.msra.mxu0 %v458
    %538 = vmatprep.subr.bf16.mxu0 0
    %539 = vmatpush1.bf16.msra.mxu0 %v459
    %540 = vmatprep.mubr.bf16.mxu0 %v242
    %541 = vmatmul.mubr.bf16.gmra.mrb[0].mxu0 %v241
    %v542 = vpop.f32.mrb[0].mxu0
    %v543 = vadd.f32 %v314, %v542
    %v544 = vpop.f32.mrb[0].mxu0
    %v545 = vpop.f32.mrb[0].mxu0
    %v546 = vadd.f32 %v314, %v545
    %v547 = vpop.f32.mrb[0].mxu0
    %548 = vdwg.mxu0
    %549 = vmatprep.subr.bf16.mxu0 0
    %550 = vmatpush1.bf16.msra.mxu0 %v460
    %551 = vmatprep.subr.bf16.mxu0 0
    %552 = vmatpush1.bf16.msra.mxu0 %v461
    %553 = vmatprep.subr.bf16.mxu0 0
    %554 = vmatpush1.bf16.msra.mxu0 %v462
    %555 = vmatprep.subr.bf16.mxu0 0
    %556 = vmatpush1.bf16.msra.mxu0 %v463
    %557 = vmatprep.subr.bf16.mxu0 0
    %558 = vmatpush1.bf16.msra.mxu0 %v464
    %559 = vmatprep.subr.bf16.mxu0 0
    %560 = vmatpush1.bf16.msra.mxu0 %v465
    %561 = vmatprep.subr.bf16.mxu0 0
    %562 = vmatpush1.bf16.msra.mxu0 %v466
    %563 = vmatprep.subr.bf16.mxu0 0
    %564 = vmatpush1.bf16.msra.mxu0 %v467
    %565 = vmatprep.subr.bf16.mxu0 0
    %566 = vmatpush1.bf16.msra.mxu0 %v468
    %567 = vmatprep.subr.bf16.mxu0 0
    %568 = vmatpush1.bf16.msra.mxu0 %v469
    %569 = vmatprep.subr.bf16.mxu0 0
    %570 = vmatpush1.bf16.msra.mxu0 %v470
    %571 = vmatprep.subr.bf16.mxu0 0
    %572 = vmatpush1.bf16.msra.mxu0 %v471
    %573 = vmatprep.subr.bf16.mxu0 0
    %574 = vmatpush1.bf16.msra.mxu0 %v472
    %575 = vmatprep.subr.bf16.mxu0 0
    %576 = vmatpush1.bf16.msra.mxu0 %v473
    %577 = vmatprep.subr.bf16.mxu0 0
    %578 = vmatpush1.bf16.msra.mxu0 %v474
    %579 = vmatprep.subr.bf16.mxu0 0
    %580 = vmatpush1.bf16.msra.mxu0 %v475
    %581 = vmatprep.mubr.bf16.mxu0 %v244
    %582 = vmatmul.mubr.bf16.gmra.mrb[0].mxu0 %v243
    %v583 = vpop.f32.mrb[0].mxu0
    %v584 = vadd.f32 %v543, %v583
    %v585 = vpop.f32.mrb[0].mxu0
    %v586 = vpop.f32.mrb[0].mxu0
    %v587 = vadd.f32 %v546, %v586
    %v588 = vpop.f32.mrb[0].mxu0
    %589 = vdwg.mxu0
    %vm590 = vcmask 261120
    %591 = vst.msk [vmem:[#allocation2] sm:$0xff] %vm590, %v584
    %592 = vst.msk [vmem:[#allocation2 + $0x8] sm:$0xff] %vm590, %v587
    // Predicated region
    $region22: #{tpu_custom_call.1} parent=1 // pred_check
      _
    $region23: #{tpu_custom_call.1} parent=1 // pred_check_branch
      %594 = sbr.rel (0) target = $region25
    $region24: #{tpu_custom_call.1} parent=1 // pred_region
      %s596 = ssub.s32 256, 256
      %597 = vsyncadd [#allocation3], %s596
      %s598 = sshll.u32 [#allocation2], 4
      %s599 = int_to_ptr.vmem [resolvable:$true] %s598
      %604 = dma.vmem_to_hbm [thread:$0]  %s599, 256, %s5, [#allocation3], 128, 128, 8
    $region25: #{tpu_custom_call.1} parent=1 // pred_fallthru
      _
    // Predicated region
    $region26: #{tpu_custom_call.1} parent=1 // pred_check
      _
    $region27: #{tpu_custom_call.1} parent=1 // pred_check_branch
      %606 = sbr.rel (0) target = $region29
    $region28: #{tpu_custom_call.1} parent=1 // pred_region
      %607 = dma.done [#allocation3], 256
    $region29: #{tpu_custom_call.1} parent=1 // pred_fallthru
      _
    %608 = vsyncpa [#allocation3], 1

</llo_original>
